<compile_context>
chip_gen: v7x
topology: tpu7x:2x2x1
jax: 0.10.0
libtpu: 0.0.40
codegen_flags: <defaults>
</compile_context>

<pallas_src>
import functools

import jax
import jax.numpy as jnp
from jax import lax
from jax.experimental import pallas as pl
from jax.experimental.pallas import tpu as pltpu

K = 7      # kernel_size
PAD = 3    # padding = kernel_size // 2  ('same' output length, stride 1)


def _ceil_div(a, b):
    return -(-a // b)


def _round_up(a, m):
    return _ceil_div(a, m) * m


def _pick_batch_tile(n, length):
    """Samples per grid step: aim for >=128 real lanes per step (lane-dense
    stores / MXU N dim) while keeping >=2 grid steps when the batch allows it
    (v7x has 2 TensorCores; v5e/v6e lose nothing from 2 steps)."""
    target = max(1, _ceil_div(128, length))   # samples needed for 128 real lanes
    bt = min(n, target)
    if n >= 2 and n // bt < 2:
        bt = _ceil_div(n, 2)                  # split into 2 groups for megacore
    return bt


def _vmem_limit_bytes():
    """Generation-aware VMEM budget: ~48 MiB on v7x (64 MiB physical per TC),
    ~100 MiB on v5e/v6e (128 MiB physical)."""
    try:
        cap = pltpu.get_tpu_info().vmem_capacity_bytes
    except Exception:                          # conservative fallback
        cap = 64 * 1024 * 1024
    return int(min(cap - 16 * 1024 * 1024, 100 * 1024 * 1024))


def residual_block_kernel(x_ref, w1_ref, b1_ref, w2_ref, b2_ref,
                          out_ref, stacked_ref, *, length):
    """One batch group per grid step; the lane axis packs (sample, position).

    x_ref       : (1, C_pad, W)     input slab (also the residual); channel
                                    rows >= C and lane cols >= BT*L are zero.
    w1_ref      : (C_pad, K*C_pad)  bf16 conv1 weight, tap-major im2col layout
    b1_ref      : (C_pad, 1)        f32
    w2_ref      : (C_pad, K*C_pad)  bf16 conv2 weight
    b2_ref      : (C_pad, 1)        f32
    out_ref     : (1, C_pad, W)
    stacked_ref : VMEM (K*C_pad, W) bf16 im2col staging, reused by both convs
    """
    c_pad = out_ref.shape[1]
    w = out_ref.shape[2]

    xv = x_ref[0]                         # single read of the input block
    x_f32 = xv.astype(jnp.float32)        # exact f32 residual path

    # Per-sample position j = lane % L and per-tap validity masks, computed
    # once and shared by both convs.  Destination column c (sample b, pos j)
    # of tap shift s is valid iff its source position j+s lies inside [0, L);
    # invalid columns are zeroed, which reproduces per-sample 'same' padding
    # and blocks cross-sample leakage at seams inside the packed slab.
    j = lax.broadcasted_iota(jnp.int32, (c_pad, w), 1) % length
    valid = []
    for k in range(K):
        s = k - PAD
        if s == 0:
            valid.append(None)
        elif s > 0:
            valid.append(j < (length - s))
        else:
            valid.append(j >= (-s))

    def im2col(act_f32):
        """stacked[k*C_pad + i, b*L + j] = act[i, b*L + j + (k - PAD)], with
        per-sample zero padding.  Each tap: static lane rotation (XLU) +
        masked select (VPU) + one aligned full-row-group store."""
        for k in range(K):
            s = k - PAD
            if s == 0:
                tap = act_f32
            else:
                rolled = pltpu.roll(act_f32, shift=(-s) % w, axis=1)
                tap = jnp.where(valid[k], rolled, 0.0)
            stacked_ref[k * c_pad:(k + 1) * c_pad, :] = tap.astype(jnp.bfloat16)

    # ---- conv1: one MXU matmul over the K*C_pad contraction ----------------
    im2col(x_f32)
    h = jnp.dot(w1_ref[...], stacked_ref[...],
                preferred_element_type=jnp.float32)          # (C_pad, W) f32
    h = jnp.maximum(h + b1_ref[...], 0.0)                    # bias + ReLU (f32)

    # ---- conv2 (padded channel rows of h are exact zeros) ------------------
    im2col(h)
    o = jnp.dot(w2_ref[...], stacked_ref[...],
                preferred_element_type=jnp.float32)
    o = jnp.maximum(o + b2_ref[...], 0.0)

    # ---- residual add (exact f32) -------------------------------------------
    out_ref[0] = (o + x_f32).astype(out_ref.dtype)


def residual_block(x, w1, b1, w2, b2):
    """x: (N, C, L).  Weights in PyTorch Conv1d layout (O, I, K), bias (O,)."""
    N, C, L = x.shape
    c_out = w1.shape[0]
    assert c_out == C, "downsample is None -> in_channels must equal out_channels"
    assert w1.shape == (C, C, K) and w2.shape == (C, C, K)
    assert b1.shape == (C,) and b2.shape == (C,)

    c_pad = _round_up(C, 16)           # bf16 sublane-tile aligned tap row groups
    bt = _pick_batch_tile(N, L)
    groups = _ceil_div(N, bt)
    n_pad = groups * bt
    width = _round_up(bt * L, 128)     # lane-dense block width (multiple of 128)

    # ---- pack the batch into lane-dense per-group slabs ---------------------
    # (N, C, L) -> (G, C_pad, W): group g holds samples [g*bt, (g+1)*bt) side
    # by side along the lane axis; padded channels / lanes / samples are zero.
    xp = x if n_pad == N else jnp.pad(x, ((0, n_pad - N), (0, 0), (0, 0)))
    x_slab = (xp.reshape(groups, bt, C, L)
                .transpose(0, 2, 1, 3)
                .reshape(groups, C, bt * L))
    x_slab = jnp.pad(x_slab, ((0, 0), (0, c_pad - C), (0, width - bt * L)))

    # (O, I, K) -> (O, K, I) -> zero-pad channels -> (C_pad, K*C_pad), bf16.
    def flatten_weight(wt):
        wt = jnp.transpose(wt, (0, 2, 1))
        wt = jnp.pad(wt, ((0, c_pad - C), (0, 0), (0, c_pad - C)))
        return wt.reshape(c_pad, K * c_pad).astype(jnp.bfloat16)

    w1_f = flatten_weight(w1)
    w2_f = flatten_weight(w2)
    b1_2d = jnp.pad(b1.astype(jnp.float32), (0, c_pad - C)).reshape(c_pad, 1)
    b2_2d = jnp.pad(b2.astype(jnp.float32), (0, c_pad - C)).reshape(c_pad, 1)

    grid_spec = pltpu.PrefetchScalarGridSpec(
        num_scalar_prefetch=0,
        grid=(groups,),
        in_specs=[
            pl.BlockSpec((1, c_pad, width),  lambda g: (g, 0, 0)),   # x slab
            pl.BlockSpec((c_pad, K * c_pad), lambda g: (0, 0)),      # w1 (resident)
            pl.BlockSpec((c_pad, 1),         lambda g: (0, 0)),      # b1
            pl.BlockSpec((c_pad, K * c_pad), lambda g: (0, 0)),      # w2 (resident)
            pl.BlockSpec((c_pad, 1),         lambda g: (0, 0)),      # b2
        ],
        out_specs=pl.BlockSpec((1, c_pad, width), lambda g: (g, 0, 0)),
        scratch_shapes=[pltpu.VMEM((K * c_pad, width), jnp.bfloat16)],
    )

    # Advisory cost hint so XLA schedules sensibly around the custom call.
    flops = 2 * 2 * C * (K * C) * L * N                     # two convs
    bytes_accessed = (2 * x.size * x.dtype.itemsize         # x in + out
                      + w1_f.size * 2 + w2_f.size * 2       # bf16 weights
                      + (b1_2d.size + b2_2d.size) * 4)
    cost = pl.CostEstimate(flops=flops, transcendentals=0,
                           bytes_accessed=bytes_accessed)

    out_slab = pl.pallas_call(
        functools.partial(residual_block_kernel, length=L),
        out_shape=jax.ShapeDtypeStruct((groups, c_pad, width), x.dtype),
        grid_spec=grid_spec,
        compiler_params=pltpu.CompilerParams(
            dimension_semantics=("parallel",),     # megacore: shard batch groups
            vmem_limit_bytes=_vmem_limit_bytes(),
        ),
        cost_estimate=cost,
    )(x_slab, w1_f, b1_2d, w2_f, b2_2d)

    # (G, C_pad, W) -> (N, C, L): drop channel / lane / batch padding.
    out = (out_slab[:, :C, :bt * L]
           .reshape(groups, C, bt, L)
           .transpose(0, 2, 1, 3)
           .reshape(n_pad, C, L))
    return out[:N]


def _reference(x, w1, b1, w2, b2, operand_dtype=jnp.float32):
    """Pure-JAX reference mirroring the PyTorch forward.  With
    operand_dtype=bf16 it feeds the convs the same bf16 operands as the
    kernel (f32 accumulation, f32 bias/ReLU/residual)."""
    dn = ('NCH', 'OIH', 'NCH')

    def conv(inp, w):
        return lax.conv_general_dilated(
            inp.astype(operand_dtype), w.astype(operand_dtype),
            window_strides=(1,), padding=[(PAD, PAD)],
            dimension_numbers=dn, preferred_element_type=jnp.float32)

    h = jnp.maximum(conv(x, w1) + b1[None, :, None], 0.0)
    h = jnp.maximum(conv(h, w2) + b2[None, :, None], 0.0)
    return h + x.astype(jnp.float32)


if __name__ == "__main__":
    # small shapes consistent with the module: batch=2, channels=4, length=16
    N, C, L = 2, 4, 16

    key = jax.random.PRNGKey(0)
    kx, k1, k2, k3, k4 = jax.random.split(key, 5)

    x = jax.random.normal(kx, (N, C, L), dtype=jnp.float32)
    # deterministic synthetic parameters (PyTorch Conv1d weight layout: O,I,K)
    w1 = 0.1 * jax.random.normal(k1, (C, C, K), dtype=jnp.float32)
    b1 = 0.05 * jax.random.normal(k2, (C,), dtype=jnp.float32)
    w2 = 0.1 * jax.random.normal(k3, (C, C, K), dtype=jnp.float32)
    b2 = 0.05 * jax.random.normal(k4, (C,), dtype=jnp.float32)

    out = jax.block_until_ready(residual_block(x, w1, b1, w2, b2))
    assert out.shape == (N, C, L)

    # Tight check vs a reference fed the same bf16 conv operands.
    ref_bf16 = _reference(x, w1, b1, w2, b2, operand_dtype=jnp.bfloat16)
    assert jnp.allclose(out, ref_bf16, atol=1e-4, rtol=1e-4), \
        "mismatch vs bf16-operand reference"

    # Loose sanity check vs the full-f32 PyTorch-equivalent forward
    # (difference is only the bf16 rounding of the MXU operands).
    ref_f32 = _reference(x, w1, b1, w2, b2, operand_dtype=jnp.float32)
    assert jnp.allclose(out, ref_f32, atol=5e-2, rtol=5e-2), \
        "mismatch vs f32 reference"

    print("KERNEL_OK")
</pallas_src>

<mosaic_0001>
module attributes {stable_mosaic.version = 11 : i64} {
  func.func @residual_block_kernel(%arg0: i32, %arg1: memref<1x16x128xf32, #tpu.memory_space<vmem>>, %arg2: memref<16x112xbf16, #tpu.memory_space<vmem>>, %arg3: memref<16x1xf32, #tpu.memory_space<vmem>>, %arg4: memref<16x112xbf16, #tpu.memory_space<vmem>>, %arg5: memref<16x1xf32, #tpu.memory_space<vmem>>, %arg6: memref<1x16x128xf32, #tpu.memory_space<vmem>>, %arg7: memref<112x128xbf16, #tpu.memory_space<vmem>>) attributes {dimension_semantics = [#tpu.dimension_semantics<parallel>], iteration_bounds = array<i64: 2>, scalar_prefetch = 0 : i64, scratch_operands = 1 : i64, tpu.core_type = #tpu.core_type<tc>, window_params = [{transform_indices = @transform_0, window_bounds = array<i64: 1, 16, 128>}, {pipeline_mode = #tpu.pipeline_mode<synchronous>, transform_indices = @transform_1, window_bounds = array<i64: 16, 112>}, {pipeline_mode = #tpu.pipeline_mode<synchronous>, transform_indices = @transform_2, window_bounds = array<i64: 16, 1>}, {pipeline_mode = #tpu.pipeline_mode<synchronous>, transform_indices = @transform_3, window_bounds = array<i64: 16, 112>}, {pipeline_mode = #tpu.pipeline_mode<synchronous>, transform_indices = @transform_4, window_bounds = array<i64: 16, 1>}, {transform_indices = @transform_5, window_bounds = array<i64: 1, 16, 128>}]} {
    %c0 = arith.constant 0 : index
    %c0_0 = arith.constant 0 : index
    %c0_1 = arith.constant 0 : index
    %0 = vector.load %arg1[%c0, %c0_0, %c0_1] : memref<1x16x128xf32, #tpu.memory_space<vmem>>, vector<1x16x128xf32>
    %1 = vector.shape_cast %0 : vector<1x16x128xf32> to vector<16x128xf32>
    %2 = tpu.iota {dimensions = array<i32: 1>} : vector<16x128xi32>
    %c16_i32 = arith.constant 16 : i32
    %c0_i32 = arith.constant 0 : i32
    %3 = arith.cmpi eq, %c16_i32, %c0_i32 : i32
    %c1_i32 = arith.constant 1 : i32
    %4 = arith.select %3, %c1_i32, %c16_i32 : i32
    %5 = vector.broadcast %4 : i32 to vector<16x128xi32>
    %6 = arith.remsi %2, %5 : vector<16x128xi32>
    %c0_i32_2 = arith.constant 0 : i32
    %7 = vector.broadcast %c0_i32_2 : i32 to vector<16x128xi32>
    %8 = arith.cmpi ne, %6, %7 : vector<16x128xi32>
    %c0_i32_3 = arith.constant 0 : i32
    %9 = vector.broadcast %c0_i32_3 : i32 to vector<16x128xi32>
    %10 = arith.cmpi slt, %6, %9 : vector<16x128xi32>
    %c0_i32_4 = arith.constant 0 : i32
    %11 = arith.cmpi slt, %4, %c0_i32_4 : i32
    %12 = vector.broadcast %11 : i1 to vector<16x128xi1>
    %13 = vector.broadcast %12 : vector<16x128xi1> to vector<16x128xi1>
    %14 = arith.xori %10, %13 : vector<16x128xi1>
    %15 = arith.andi %14, %8 : vector<16x128xi1>
    %16 = vector.broadcast %4 : i32 to vector<16x128xi32>
    %17 = arith.addi %6, %16 : vector<16x128xi32>
    %18 = arith.select %15, %17, %6 : vector<16x128xi1>, vector<16x128xi32>
    %c3_i32 = arith.constant 3 : i32
    %19 = vector.broadcast %c3_i32 : i32 to vector<16x128xi32>
    %20 = arith.cmpi sge, %18, %19 : vector<16x128xi32>
    %c2_i32 = arith.constant 2 : i32
    %21 = vector.broadcast %c2_i32 : i32 to vector<16x128xi32>
    %22 = arith.cmpi sge, %18, %21 : vector<16x128xi32>
    %c1_i32_5 = arith.constant 1 : i32
    %23 = vector.broadcast %c1_i32_5 : i32 to vector<16x128xi32>
    %24 = arith.cmpi sge, %18, %23 : vector<16x128xi32>
    %c15_i32 = arith.constant 15 : i32
    %25 = vector.broadcast %c15_i32 : i32 to vector<16x128xi32>
    %26 = arith.cmpi slt, %18, %25 : vector<16x128xi32>
    %c14_i32 = arith.constant 14 : i32
    %27 = vector.broadcast %c14_i32 : i32 to vector<16x128xi32>
    %28 = arith.cmpi slt, %18, %27 : vector<16x128xi32>
    %c13_i32 = arith.constant 13 : i32
    %29 = vector.broadcast %c13_i32 : i32 to vector<16x128xi32>
    %30 = arith.cmpi slt, %18, %29 : vector<16x128xi32>
    %c3_i32_6 = arith.constant 3 : i32
    %31 = tpu.dynamic_rotate %1 by %c3_i32_6 dim 1 : vector<16x128xf32>, i32 -> vector<16x128xf32>
    %cst = arith.constant 0.000000e+00 : f32
    %32 = vector.broadcast %cst : f32 to vector<16x128xf32>
    %33 = arith.select %20, %31, %32 : vector<16x128xi1>, vector<16x128xf32>
    %34 = arith.truncf %33 : vector<16x128xf32> to vector<16x128xbf16>
    %c0_7 = arith.constant 0 : index
    %c0_8 = arith.constant 0 : index
    %35 = vector.load %arg7[%c0_7, %c0_8] : memref<112x128xbf16, #tpu.memory_space<vmem>>, vector<16x128xbf16>
    tpu.vector_store %arg7[%c0_7, %c0_8], %34 {strides = array<i32>} : memref<112x128xbf16, #tpu.memory_space<vmem>>, vector<16x128xbf16>,
    %c2_i32_9 = arith.constant 2 : i32
    %36 = tpu.dynamic_rotate %1 by %c2_i32_9 dim 1 : vector<16x128xf32>, i32 -> vector<16x128xf32>
    %cst_10 = arith.constant 0.000000e+00 : f32
    %37 = vector.broadcast %cst_10 : f32 to vector<16x128xf32>
    %38 = arith.select %22, %36, %37 : vector<16x128xi1>, vector<16x128xf32>
    %39 = arith.truncf %38 : vector<16x128xf32> to vector<16x128xbf16>
    %c16 = arith.constant 16 : index
    %c0_11 = arith.constant 0 : index
    %40 = vector.load %arg7[%c16, %c0_11] : memref<112x128xbf16, #tpu.memory_space<vmem>>, vector<16x128xbf16>
    tpu.vector_store %arg7[%c16, %c0_11], %39 {strides = array<i32>} : memref<112x128xbf16, #tpu.memory_space<vmem>>, vector<16x128xbf16>,
    %c1_i32_12 = arith.constant 1 : i32
    %41 = tpu.dynamic_rotate %1 by %c1_i32_12 dim 1 : vector<16x128xf32>, i32 -> vector<16x128xf32>
    %cst_13 = arith.constant 0.000000e+00 : f32
    %42 = vector.broadcast %cst_13 : f32 to vector<16x128xf32>
    %43 = arith.select %24, %41, %42 : vector<16x128xi1>, vector<16x128xf32>
    %44 = arith.truncf %43 : vector<16x128xf32> to vector<16x128xbf16>
    %c32 = arith.constant 32 : index
    %c0_14 = arith.constant 0 : index
    %45 = vector.load %arg7[%c32, %c0_14] : memref<112x128xbf16, #tpu.memory_space<vmem>>, vector<16x128xbf16>
    tpu.vector_store %arg7[%c32, %c0_14], %44 {strides = array<i32>} : memref<112x128xbf16, #tpu.memory_space<vmem>>, vector<16x128xbf16>,
    %46 = arith.truncf %1 : vector<16x128xf32> to vector<16x128xbf16>
    %c48 = arith.constant 48 : index
    %c0_15 = arith.constant 0 : index
    %47 = vector.load %arg7[%c48, %c0_15] : memref<112x128xbf16, #tpu.memory_space<vmem>>, vector<16x128xbf16>
    tpu.vector_store %arg7[%c48, %c0_15], %46 {strides = array<i32>} : memref<112x128xbf16, #tpu.memory_space<vmem>>, vector<16x128xbf16>,
    %c127_i32 = arith.constant 127 : i32
    %48 = tpu.dynamic_rotate %1 by %c127_i32 dim 1 : vector<16x128xf32>, i32 -> vector<16x128xf32>
    %cst_16 = arith.constant 0.000000e+00 : f32
    %49 = vector.broadcast %cst_16 : f32 to vector<16x128xf32>
    %50 = arith.select %26, %48, %49 : vector<16x128xi1>, vector<16x128xf32>
    %51 = arith.truncf %50 : vector<16x128xf32> to vector<16x128xbf16>
    %c64 = arith.constant 64 : index
    %c0_17 = arith.constant 0 : index
    %52 = vector.load %arg7[%c64, %c0_17] : memref<112x128xbf16, #tpu.memory_space<vmem>>, vector<16x128xbf16>
    tpu.vector_store %arg7[%c64, %c0_17], %51 {strides = array<i32>} : memref<112x128xbf16, #tpu.memory_space<vmem>>, vector<16x128xbf16>,
    %c126_i32 = arith.constant 126 : i32
    %53 = tpu.dynamic_rotate %1 by %c126_i32 dim 1 : vector<16x128xf32>, i32 -> vector<16x128xf32>
    %cst_18 = arith.constant 0.000000e+00 : f32
    %54 = vector.broadcast %cst_18 : f32 to vector<16x128xf32>
    %55 = arith.select %28, %53, %54 : vector<16x128xi1>, vector<16x128xf32>
    %56 = arith.truncf %55 : vector<16x128xf32> to vector<16x128xbf16>
    %c80 = arith.constant 80 : index
    %c0_19 = arith.constant 0 : index
    %57 = vector.load %arg7[%c80, %c0_19] : memref<112x128xbf16, #tpu.memory_space<vmem>>, vector<16x128xbf16>
    tpu.vector_store %arg7[%c80, %c0_19], %56 {strides = array<i32>} : memref<112x128xbf16, #tpu.memory_space<vmem>>, vector<16x128xbf16>,
    %c125_i32 = arith.constant 125 : i32
    %58 = tpu.dynamic_rotate %1 by %c125_i32 dim 1 : vector<16x128xf32>, i32 -> vector<16x128xf32>
    %cst_20 = arith.constant 0.000000e+00 : f32
    %59 = vector.broadcast %cst_20 : f32 to vector<16x128xf32>
    %60 = arith.select %30, %58, %59 : vector<16x128xi1>, vector<16x128xf32>
    %61 = arith.truncf %60 : vector<16x128xf32> to vector<16x128xbf16>
    %c96 = arith.constant 96 : index
    %c0_21 = arith.constant 0 : index
    %62 = vector.load %arg7[%c96, %c0_21] : memref<112x128xbf16, #tpu.memory_space<vmem>>, vector<16x128xbf16>
    tpu.vector_store %arg7[%c96, %c0_21], %61 {strides = array<i32>} : memref<112x128xbf16, #tpu.memory_space<vmem>>, vector<16x128xbf16>,
    %c0_22 = arith.constant 0 : index
    %c0_23 = arith.constant 0 : index
    %63 = vector.load %arg2[%c0_22, %c0_23] : memref<16x112xbf16, #tpu.memory_space<vmem>>, vector<16x112xbf16>
    %c0_24 = arith.constant 0 : index
    %c0_25 = arith.constant 0 : index
    %64 = vector.load %arg7[%c0_24, %c0_25] : memref<112x128xbf16, #tpu.memory_space<vmem>>, vector<112x128xbf16>
    %cst_26 = arith.constant dense<0.000000e+00> : vector<16x128xf32>
    %65 = tpu.matmul %63, %64, %cst_26 {dimension_numbers = #tpu.dot_dimension_numbers<[1], [0], [0], [1], [0, 0, 1, 1], [], []>} : vector<16x112xbf16>, vector<112x128xbf16>, vector<16x128xf32> -> vector<16x128xf32>
    %c0_27 = arith.constant 0 : index
    %c0_28 = arith.constant 0 : index
    %66 = vector.load %arg3[%c0_27, %c0_28] : memref<16x1xf32, #tpu.memory_space<vmem>>, vector<16x1xf32>
    %67 = vector.broadcast %66 : vector<16x1xf32> to vector<16x128xf32>
    %68 = arith.addf %65, %67 : vector<16x128xf32>
    %cst_29 = arith.constant 0.000000e+00 : f32
    %69 = vector.broadcast %cst_29 : f32 to vector<16x128xf32>
    %70 = arith.maximumf %68, %69 : vector<16x128xf32>
    %c3_i32_30 = arith.constant 3 : i32
    %71 = tpu.dynamic_rotate %70 by %c3_i32_30 dim 1 : vector<16x128xf32>, i32 -> vector<16x128xf32>
    %cst_31 = arith.constant 0.000000e+00 : f32
    %72 = vector.broadcast %cst_31 : f32 to vector<16x128xf32>
    %73 = arith.select %20, %71, %72 : vector<16x128xi1>, vector<16x128xf32>
    %74 = arith.truncf %73 : vector<16x128xf32> to vector<16x128xbf16>
    %c0_32 = arith.constant 0 : index
    %c0_33 = arith.constant 0 : index
    %75 = vector.load %arg7[%c0_32, %c0_33] : memref<112x128xbf16, #tpu.memory_space<vmem>>, vector<16x128xbf16>
    tpu.vector_store %arg7[%c0_32, %c0_33], %74 {strides = array<i32>} : memref<112x128xbf16, #tpu.memory_space<vmem>>, vector<16x128xbf16>,
    %c2_i32_34 = arith.constant 2 : i32
    %76 = tpu.dynamic_rotate %70 by %c2_i32_34 dim 1 : vector<16x128xf32>, i32 -> vector<16x128xf32>
    %cst_35 = arith.constant 0.000000e+00 : f32
    %77 = vector.broadcast %cst_35 : f32 to vector<16x128xf32>
    %78 = arith.select %22, %76, %77 : vector<16x128xi1>, vector<16x128xf32>
    %79 = arith.truncf %78 : vector<16x128xf32> to vector<16x128xbf16>
    %c16_36 = arith.constant 16 : index
    %c0_37 = arith.constant 0 : index
    %80 = vector.load %arg7[%c16_36, %c0_37] : memref<112x128xbf16, #tpu.memory_space<vmem>>, vector<16x128xbf16>
    tpu.vector_store %arg7[%c16_36, %c0_37], %79 {strides = array<i32>} : memref<112x128xbf16, #tpu.memory_space<vmem>>, vector<16x128xbf16>,
    %c1_i32_38 = arith.constant 1 : i32
    %81 = tpu.dynamic_rotate %70 by %c1_i32_38 dim 1 : vector<16x128xf32>, i32 -> vector<16x128xf32>
    %cst_39 = arith.constant 0.000000e+00 : f32
    %82 = vector.broadcast %cst_39 : f32 to vector<16x128xf32>
    %83 = arith.select %24, %81, %82 : vector<16x128xi1>, vector<16x128xf32>
    %84 = arith.truncf %83 : vector<16x128xf32> to vector<16x128xbf16>
    %c32_40 = arith.constant 32 : index
    %c0_41 = arith.constant 0 : index
    %85 = vector.load %arg7[%c32_40, %c0_41] : memref<112x128xbf16, #tpu.memory_space<vmem>>, vector<16x128xbf16>
    tpu.vector_store %arg7[%c32_40, %c0_41], %84 {strides = array<i32>} : memref<112x128xbf16, #tpu.memory_space<vmem>>, vector<16x128xbf16>,
    %86 = arith.truncf %70 : vector<16x128xf32> to vector<16x128xbf16>
    %c48_42 = arith.constant 48 : index
    %c0_43 = arith.constant 0 : index
    %87 = vector.load %arg7[%c48_42, %c0_43] : memref<112x128xbf16, #tpu.memory_space<vmem>>, vector<16x128xbf16>
    tpu.vector_store %arg7[%c48_42, %c0_43], %86 {strides = array<i32>} : memref<112x128xbf16, #tpu.memory_space<vmem>>, vector<16x128xbf16>,
    %c127_i32_44 = arith.constant 127 : i32
    %88 = tpu.dynamic_rotate %70 by %c127_i32_44 dim 1 : vector<16x128xf32>, i32 -> vector<16x128xf32>
    %cst_45 = arith.constant 0.000000e+00 : f32
    %89 = vector.broadcast %cst_45 : f32 to vector<16x128xf32>
    %90 = arith.select %26, %88, %89 : vector<16x128xi1>, vector<16x128xf32>
    %91 = arith.truncf %90 : vector<16x128xf32> to vector<16x128xbf16>
    %c64_46 = arith.constant 64 : index
    %c0_47 = arith.constant 0 : index
    %92 = vector.load %arg7[%c64_46, %c0_47] : memref<112x128xbf16, #tpu.memory_space<vmem>>, vector<16x128xbf16>
    tpu.vector_store %arg7[%c64_46, %c0_47], %91 {strides = array<i32>} : memref<112x128xbf16, #tpu.memory_space<vmem>>, vector<16x128xbf16>,
    %c126_i32_48 = arith.constant 126 : i32
    %93 = tpu.dynamic_rotate %70 by %c126_i32_48 dim 1 : vector<16x128xf32>, i32 -> vector<16x128xf32>
    %cst_49 = arith.constant 0.000000e+00 : f32
    %94 = vector.broadcast %cst_49 : f32 to vector<16x128xf32>
    %95 = arith.select %28, %93, %94 : vector<16x128xi1>, vector<16x128xf32>
    %96 = arith.truncf %95 : vector<16x128xf32> to vector<16x128xbf16>
    %c80_50 = arith.constant 80 : index
    %c0_51 = arith.constant 0 : index
    %97 = vector.load %arg7[%c80_50, %c0_51] : memref<112x128xbf16, #tpu.memory_space<vmem>>, vector<16x128xbf16>
    tpu.vector_store %arg7[%c80_50, %c0_51], %96 {strides = array<i32>} : memref<112x128xbf16, #tpu.memory_space<vmem>>, vector<16x128xbf16>,
    %c125_i32_52 = arith.constant 125 : i32
    %98 = tpu.dynamic_rotate %70 by %c125_i32_52 dim 1 : vector<16x128xf32>, i32 -> vector<16x128xf32>
    %cst_53 = arith.constant 0.000000e+00 : f32
    %99 = vector.broadcast %cst_53 : f32 to vector<16x128xf32>
    %100 = arith.select %30, %98, %99 : vector<16x128xi1>, vector<16x128xf32>
    %101 = arith.truncf %100 : vector<16x128xf32> to vector<16x128xbf16>
    %c96_54 = arith.constant 96 : index
    %c0_55 = arith.constant 0 : index
    %102 = vector.load %arg7[%c96_54, %c0_55] : memref<112x128xbf16, #tpu.memory_space<vmem>>, vector<16x128xbf16>
    tpu.vector_store %arg7[%c96_54, %c0_55], %101 {strides = array<i32>} : memref<112x128xbf16, #tpu.memory_space<vmem>>, vector<16x128xbf16>,
    %c0_56 = arith.constant 0 : index
    %c0_57 = arith.constant 0 : index
    %103 = vector.load %arg4[%c0_56, %c0_57] : memref<16x112xbf16, #tpu.memory_space<vmem>>, vector<16x112xbf16>
    %c0_58 = arith.constant 0 : index
    %c0_59 = arith.constant 0 : index
    %104 = vector.load %arg7[%c0_58, %c0_59] : memref<112x128xbf16, #tpu.memory_space<vmem>>, vector<112x128xbf16>
    %cst_60 = arith.constant dense<0.000000e+00> : vector<16x128xf32>
    %105 = tpu.matmul %103, %104, %cst_60 {dimension_numbers = #tpu.dot_dimension_numbers<[1], [0], [0], [1], [0, 0, 1, 1], [], []>} : vector<16x112xbf16>, vector<112x128xbf16>, vector<16x128xf32> -> vector<16x128xf32>
    %c0_61 = arith.constant 0 : index
    %c0_62 = arith.constant 0 : index
    %106 = vector.load %arg5[%c0_61, %c0_62] : memref<16x1xf32, #tpu.memory_space<vmem>>, vector<16x1xf32>
    %107 = vector.broadcast %106 : vector<16x1xf32> to vector<16x128xf32>
    %108 = arith.addf %105, %107 : vector<16x128xf32>
    %cst_63 = arith.constant 0.000000e+00 : f32
    %109 = vector.broadcast %cst_63 : f32 to vector<16x128xf32>
    %110 = arith.maximumf %108, %109 : vector<16x128xf32>
    %111 = arith.addf %110, %1 : vector<16x128xf32>
    %c0_64 = arith.constant 0 : index
    %c0_65 = arith.constant 0 : index
    %c0_66 = arith.constant 0 : index
    %112 = vector.load %arg6[%c0_64, %c0_65, %c0_66] : memref<1x16x128xf32, #tpu.memory_space<vmem>>, vector<1x16x128xf32>
    %113 = vector.shape_cast %112 : vector<1x16x128xf32> to vector<16x128xf32>
    %114 = vector.shape_cast %111 : vector<16x128xf32> to vector<1x16x128xf32>
    tpu.vector_store %arg6[%c0_64, %c0_65, %c0_66], %114 {strides = array<i32>} : memref<1x16x128xf32, #tpu.memory_space<vmem>>, vector<1x16x128xf32>,
    return
  }
  func.func @transform_0(%arg0: i32) -> (i32, i32, i32) {
    %c0_i32 = arith.constant 0 : i32
    %c0_i32_0 = arith.constant 0 : i32
    %c0_i32_1 = arith.constant 0 : i32
    return %arg0, %c0_i32, %c0_i32_0 : i32, i32, i32
  }
  func.func @transform_1(%arg0: i32) -> (i32, i32) {
    %c0_i32 = arith.constant 0 : i32
    %c0_i32_0 = arith.constant 0 : i32
    %c0_i32_1 = arith.constant 0 : i32
    return %c0_i32, %c0_i32_0 : i32, i32
  }
  func.func @transform_2(%arg0: i32) -> (i32, i32) {
    %c0_i32 = arith.constant 0 : i32
    %c0_i32_0 = arith.constant 0 : i32
    %c0_i32_1 = arith.constant 0 : i32
    return %c0_i32, %c0_i32_0 : i32, i32
  }
  func.func @transform_3(%arg0: i32) -> (i32, i32) {
    %c0_i32 = arith.constant 0 : i32
    %c0_i32_0 = arith.constant 0 : i32
    %c0_i32_1 = arith.constant 0 : i32
    return %c0_i32, %c0_i32_0 : i32, i32
  }
  func.func @transform_4(%arg0: i32) -> (i32, i32) {
    %c0_i32 = arith.constant 0 : i32
    %c0_i32_0 = arith.constant 0 : i32
    %c0_i32_1 = arith.constant 0 : i32
    return %c0_i32, %c0_i32_0 : i32, i32
  }
  func.func @transform_5(%arg0: i32) -> (i32, i32, i32) {
    %c0_i32 = arith.constant 0 : i32
    %c0_i32_0 = arith.constant 0 : i32
    %c0_i32_1 = arith.constant 0 : i32
    return %arg0, %c0_i32, %c0_i32_0 : i32, i32, i32
  }
}

</mosaic_0001>

<llo_original>
// kernel: tpu_custom_call.1
$region0: #{tpu_custom_call.1}
  #allocation0 [shape = 'u32[]', space=smem, size = 0x4, offset = 0x4, fixed_abs, tag = 'smem constant byte address 0x4 - core index']
  #allocation1 [shape = 'u32[144,128]{1,0:T(1,128)}', space=vmem, size = 0x12000, scoped, tag = 'internal scratch']
  #allocation2 [shape = 'bf16[112,128]{1,0:T(16,128)(2,1)}', space=vmem, size = 0x7000, scoped, tag = 'scratch operand']
  %s0 = inlined_call_operand.vmem [shape: f32[2,16,128], index: 0, kind: input, shape index: {}]
  %s1 = inlined_call_operand.hbm [shape: bf16[16,112], index: 1, kind: input, shape index: {}]
  %s2 = inlined_call_operand.vmem [shape: f32[16,1], index: 2, kind: input, shape index: {}]
  %s3 = inlined_call_operand.vmem [shape: bf16[16,112], index: 3, kind: input, shape index: {}]
  %s4 = inlined_call_operand.vmem [shape: f32[16,1], index: 4, kind: input, shape index: {}]
  %s5 = inlined_call_operand.hbm [shape: f32[2,16,128], index: 5, kind: output, shape index: {}]
  %s6 = sld [smem:[#allocation0]]
  $region57: #{tpu_custom_call.1} parent=0
    _
  %s8 = ssub.s32 1, %s6
  %s9 = scalar_select 0, %s8, %s6
  $region1: #{tpu_custom_call.1} parent=0
    #allocation3 [shape = 'u8[4096]{0}', space=vmem, size = 0x1000, scoped, tag = 'input window, operand 1, single buffered']
    #allocation4 [shape = 's32[2]{0}', space=sflag, size = 0x8, scoped, tag = 'scoped memory for tpu_custom_call.1']
    #allocation5 [shape = 's32[2]{0}', space=sflag, size = 0x8, scoped, tag = 'scoped memory for tpu_custom_call.1']
    #allocation6 [shape = 'u8[16384]{0}', space=vmem, size = 0x4000, scoped, tag = 'output window, operand 0']
    %10 = vsyncpa [#allocation4], 0
    %11 = vsyncpa [#allocation5], 0
    %s12 = scalar_lea.sflag [#allocation5], 1
    %13 = vsyncpa %s12, 0
    loop: start=0, step=1, limit=4
    $region2: #{tpu_custom_call.1} parent=1 // loop_pre_header
      _
    $region3: #{tpu_custom_call.1} parent=1 // loop_header
      %s15 = sphi 0, %s19
      %p16 = scmp.ge.s32.totalorder %s15, 4
      %s25 = sphi 0, %s27
      %s28 = sphi 0, %s25
      %s29 = sphi 0, %s28
      %s45 = sphi 0, %s29
      %s49 = sphi 0, %s49
      %s51 = sphi 0, %s49
      %s52 = sphi 0, %s51
      %s66 = sphi 0, %s52
      %s70 = sphi 0, %s70
      %s72 = sphi 0, %s70
      %s73 = sphi 0, %s72
      %s87 = sphi 0, %s73
      %s91 = sphi 0, %s91
      %s93 = sphi 0, %s91
      %s94 = sphi 0, %s93
      %s108 = sphi 0, %s94
      %s112 = sphi 0, %s112
      %s114 = sphi 0, %s112
      %s115 = sphi 0, %s114
      %s129 = sphi 0, %s115
      %s135 = sphi 0, %s137
      %s138 = sphi 0, %s135
      %s139 = sphi 0, %s138
      %s155 = sphi 0, %s139
    $region4: #{tpu_custom_call.1} parent=1 // loop_header_branch
      %18 = sbr.rel (%p16) target = $region8
    $region5: #{tpu_custom_call.1} parent=1 // loop_body
      %s20 = ssub.s32 %s15, 1
      %s21 = ssub.s32 %s15, 2
      %s22 = sadd.s32 %s15, 1
      %s23 = ssub.s32 %s15, %s22
      %p24 = scmp.eq.s32.totalorder %s23, 0
      %s26 = sadd.s32 %s25, 1
      %s27 = scalar_select %p24, %s25, %s26
      %p30 = pneg %p24
      %p31 = scmp.eq.s32.totalorder %s15, 1
      %p32 = por %p30, %p31
      %p33 = scmp.ne.s32.totalorder %s25, %s28
      %p34 = scmp.eq.s32.totalorder %s15, 0
      %p35 = por %p33, %p34
      %p36 = scmp.ne.s32.totalorder %s25, %s28
      %p37 = scmp.eq.s32.totalorder %s20, 1
      %p38 = por %p36, %p37
      %p39 = scmp.ne.s32.totalorder %s28, %s29
      %p40 = scmp.eq.s32.totalorder %s20, 0
      %p41 = por %p39, %p40
      %p42 = scmp.ne.s32.totalorder %s28, %s29
      %p43 = scmp.eq.s32.totalorder %s21, 1
      %p44 = por %p42, %p43
      %p46 = scmp.ne.s32.totalorder %s29, %s45
      %p47 = scmp.eq.s32.totalorder %s21, 0
      %p48 = por %p46, %p47
      %s50 = sadd.s32 %s49, 1
      %p53 = scmp.eq.s32.totalorder %s15, 1
      %p54 = scmp.ne.s32.totalorder %s49, %s51
      %p55 = scmp.eq.s32.totalorder %s15, 0
      %p56 = por %p54, %p55
      %p57 = scmp.ne.s32.totalorder %s49, %s51
      %p58 = scmp.eq.s32.totalorder %s20, 1
      %p59 = por %p57, %p58
      %p60 = scmp.ne.s32.totalorder %s51, %s52
      %p61 = scmp.eq.s32.totalorder %s20, 0
      %p62 = por %p60, %p61
      %p63 = scmp.ne.s32.totalorder %s51, %s52
      %p64 = scmp.eq.s32.totalorder %s21, 1
      %p65 = por %p63, %p64
      %p67 = scmp.ne.s32.totalorder %s52, %s66
      %p68 = scmp.eq.s32.totalorder %s21, 0
      %p69 = por %p67, %p68
      %s71 = sadd.s32 %s70, 1
      %p74 = scmp.eq.s32.totalorder %s15, 1
      %p75 = scmp.ne.s32.totalorder %s70, %s72
      %p76 = scmp.eq.s32.totalorder %s15, 0
      %p77 = por %p75, %p76
      %p78 = scmp.ne.s32.totalorder %s70, %s72
      %p79 = scmp.eq.s32.totalorder %s20, 1
      %p80 = por %p78, %p79
      %p81 = scmp.ne.s32.totalorder %s72, %s73
      %p82 = scmp.eq.s32.totalorder %s20, 0
      %p83 = por %p81, %p82
      %p84 = scmp.ne.s32.totalorder %s72, %s73
      %p85 = scmp.eq.s32.totalorder %s21, 1
      %p86 = por %p84, %p85
      %p88 = scmp.ne.s32.totalorder %s73, %s87
      %p89 = scmp.eq.s32.totalorder %s21, 0
      %p90 = por %p88, %p89
      %s92 = sadd.s32 %s91, 1
      %p95 = scmp.eq.s32.totalorder %s15, 1
      %p96 = scmp.ne.s32.totalorder %s91, %s93
      %p97 = scmp.eq.s32.totalorder %s15, 0
      %p98 = por %p96, %p97
      %p99 = scmp.ne.s32.totalorder %s91, %s93
      %p100 = scmp.eq.s32.totalorder %s20, 1
      %p101 = por %p99, %p100
      %p102 = scmp.ne.s32.totalorder %s93, %s94
      %p103 = scmp.eq.s32.totalorder %s20, 0
      %p104 = por %p102, %p103
      %p105 = scmp.ne.s32.totalorder %s93, %s94
      %p106 = scmp.eq.s32.totalorder %s21, 1
      %p107 = por %p105, %p106
      %p109 = scmp.ne.s32.totalorder %s94, %s108
      %p110 = scmp.eq.s32.totalorder %s21, 0
      %p111 = por %p109, %p110
      %s113 = sadd.s32 %s112, 1
      %p116 = scmp.eq.s32.totalorder %s15, 1
      %p117 = scmp.ne.s32.totalorder %s112, %s114
      %p118 = scmp.eq.s32.totalorder %s15, 0
      %p119 = por %p117, %p118
      %p120 = scmp.ne.s32.totalorder %s112, %s114
      %p121 = scmp.eq.s32.totalorder %s20, 1
      %p122 = por %p120, %p121
      %p123 = scmp.ne.s32.totalorder %s114, %s115
      %p124 = scmp.eq.s32.totalorder %s20, 0
      %p125 = por %p123, %p124
      %p126 = scmp.ne.s32.totalorder %s114, %s115
      %p127 = scmp.eq.s32.totalorder %s21, 1
      %p128 = por %p126, %p127
      %p130 = scmp.ne.s32.totalorder %s115, %s129
      %p131 = scmp.eq.s32.totalorder %s21, 0
      %p132 = por %p130, %p131
      %s133 = ssub.s32 %s15, %s22
      %p134 = scmp.eq.s32.totalorder %s133, 0
      %s136 = sadd.s32 %s135, 1
      %s137 = scalar_select %p134, %s135, %s136
      %p140 = pneg %p134
      %p141 = scmp.eq.s32.totalorder %s15, 1
      %p142 = por %p140, %p141
      %p143 = scmp.ne.s32.totalorder %s135, %s138
      %p144 = scmp.eq.s32.totalorder %s15, 0
      %p145 = por %p143, %p144
      %p146 = scmp.ne.s32.totalorder %s135, %s138
      %p147 = scmp.eq.s32.totalorder %s20, 1
      %p148 = por %p146, %p147
      %p149 = scmp.ne.s32.totalorder %s138, %s139
      %p150 = scmp.eq.s32.totalorder %s20, 0
      %p151 = por %p149, %p150
      %p152 = scmp.ne.s32.totalorder %s138, %s139
      %p153 = scmp.eq.s32.totalorder %s21, 1
      %p154 = por %p152, %p153
      %p156 = scmp.ne.s32.totalorder %s139, %s155
      %p157 = scmp.eq.s32.totalorder %s21, 0
      %p158 = por %p156, %p157
      %p159 = scmp.le.s32.totalorder 1, %s15
      %p160 = scmp.lt.s32.totalorder %s15, 3
      %p161 = pnand %p159, %p160
      %p162 = pneg %p161
      // Predicated region
      $region9: #{tpu_custom_call.1} parent=5 // pred_check
        _
      $region10: #{tpu_custom_call.1} parent=5 // pred_check_branch
        %164 = sbr.rel (%p161) target = $region12
      $region11: #{tpu_custom_call.1} parent=5 // pred_region
        %s165 = ssub.s32 %s15, 1
        // Predicated region
        $region13: #{tpu_custom_call.1} parent=11 // pred_check
          %p166 = pneg %p62
        $region14: #{tpu_custom_call.1} parent=11 // pred_check_branch
          %168 = sbr.rel (%p166) target = $region16
        $region15: #{tpu_custom_call.1} parent=11 // pred_region
          %s170 = ssub.s32 128, 128
          %171 = vsyncadd [#allocation4], %s170
          %s172 = sshll.u32 [#allocation3], 4
          %s173 = int_to_ptr.vmem [resolvable:$true] %s172
          %178 = dma.hbm_to_vmem [thread:$0]  %s1, 128, %s173, [#allocation4], 64, 64, 4
        $region16: #{tpu_custom_call.1} parent=11 // pred_fallthru
          _
        // Predicated region
        $region17: #{tpu_custom_call.1} parent=11 // pred_check
          %p179 = pneg %p83
        $region18: #{tpu_custom_call.1} parent=11 // pred_check_branch
          %181 = sbr.rel (%p179) target = $region20
        $region19: #{tpu_custom_call.1} parent=11 // pred_region
          _
        $region20: #{tpu_custom_call.1} parent=11 // pred_fallthru
          _
        // Predicated region
        $region21: #{tpu_custom_call.1} parent=11 // pred_check
          %p182 = pneg %p104
        $region22: #{tpu_custom_call.1} parent=11 // pred_check_branch
          %184 = sbr.rel (%p182) target = $region24
        $region23: #{tpu_custom_call.1} parent=11 // pred_region
          _
        $region24: #{tpu_custom_call.1} parent=11 // pred_fallthru
          _
        // Predicated region
        $region25: #{tpu_custom_call.1} parent=11 // pred_check
          %p185 = pneg %p125
        $region26: #{tpu_custom_call.1} parent=11 // pred_check_branch
          %187 = sbr.rel (%p185) target = $region28
        $region27: #{tpu_custom_call.1} parent=11 // pred_region
          _
        $region28: #{tpu_custom_call.1} parent=11 // pred_fallthru
          _
      $region12: #{tpu_custom_call.1} parent=5 // pred_fallthru
        _
      %p188 = scmp.lt.s32.totalorder %s15, 2
      // Predicated region
      $region29: #{tpu_custom_call.1} parent=5 // pred_check
        %p189 = pneg %p188
      $region30: #{tpu_custom_call.1} parent=5 // pred_check_branch
        %191 = sbr.rel (%p189) target = $region32
      $region31: #{tpu_custom_call.1} parent=5 // pred_region
        // Predicated region
        $region33: #{tpu_custom_call.1} parent=31 // pred_check
          %p192 = pneg %p35
        $region34: #{tpu_custom_call.1} parent=31 // pred_check_branch
          %194 = sbr.rel (%p192) target = $region36
        $region35: #{tpu_custom_call.1} parent=31 // pred_region
          %p195 = scmp.lt.s32.totalorder %s15, 1
          %s196 = scalar_select %p195, %s15, 1
          %s197 = smul.addr %s196, 2
          %s198 = smul.addr %s197, 8
          %s199 = scalar_lea.vmem %s0, %s198
        $region36: #{tpu_custom_call.1} parent=31 // pred_fallthru
          _
      $region32: #{tpu_custom_call.1} parent=5 // pred_fallthru
        _
      %p200 = scmp.le.s32.totalorder 1, %s15
      %p201 = scmp.lt.s32.totalorder %s15, 3
      %p202 = pnand %p200, %p201
      %p203 = pneg %p202
      // Predicated region
      $region37: #{tpu_custom_call.1} parent=5 // pred_check
        _
      $region38: #{tpu_custom_call.1} parent=5 // pred_check_branch
        %205 = sbr.rel (%p202) target = $region40
      $region39: #{tpu_custom_call.1} parent=5 // pred_region
        %s206 = ssub.s32 %s15, 1
        // Predicated region
        $region41: #{tpu_custom_call.1} parent=39 // pred_check
          %p207 = pneg %p62
        $region42: #{tpu_custom_call.1} parent=39 // pred_check_branch
          %209 = sbr.rel (%p207) target = $region44
        $region43: #{tpu_custom_call.1} parent=39 // pred_region
          %210 = dma.done [#allocation4], 128
        $region44: #{tpu_custom_call.1} parent=39 // pred_fallthru
          _
        %p211 = scmp.lt.s32.totalorder %s20, 1
        %s212 = scalar_select %p211, %s20, 1
        %s213 = smul.addr %s212, 2
        %s214 = smul.addr %s213, 8
        %s215 = scalar_lea.vmem %s0, %s214
        %p216 = pneg %p41
        %p217 = pneg %p38
        %p218 = pneg %p62
        %p219 = pneg %p59
        %p220 = pneg %p83
        %p221 = pneg %p80
        %p222 = pneg %p104
        %p223 = pneg %p101
        %p224 = pneg %p125
        %p225 = pneg %p122
        %p226 = pneg %p151
        %p227 = pneg %p148
        %s228 = sand.u32 %s138, 1
        %s229 = scalar_lea.sflag [#allocation5], %s228
        %s230 = sand.u32 %s138, 1
        %s231 = smul.addr %s230, 16
        %s232 = scalar_lea.vmem [#allocation6], %s231
        %p233 = scmp.lt.s32.totalorder %s20, 1
        %s234 = scalar_select %p233, %s20, 1
        %s235 = smul.addr %s234, 2
        %s236 = smul.addr %s235, 8
        %s237 = scalar_lea.vmem %s0, %s236
        %v239 = vld [vmem:[%s237] sm:$0xff]
        %v240 = vld [vmem:[%s237 + $0x8] sm:$0xff]
        %v241 = vlaneseq
        %v242 = vand.u32 %v241, 127
        %vm243 = vcmp.lt.s32.totalorder %v242, 0
        %v244 = vsub.s32 0, %v242
        %v245 = vsel %vm243, %v244, %v242
        %v246 = vshrl.u32 %v245, 4
        %v247 = vand.u32 %v245, 15
        %v248 = vsub.s32 0, %v247
        %v249 = vsel %vm243, %v248, %v247
        %vm250 = vcmp.ne.s32.totalorder %v249, 0
        %vm251 = vcmp.lt.s32.totalorder %v249, 0
        %vm252 = vmand %vm251, %vm250
        %v253 = vadd.s32 %v249, 16
        %v254 = vsel %vm252, %v253, %v249
        %vm255 = vcmp.ge.s32.totalorder %v254, 3
        %vm256 = vcmp.ge.s32.totalorder %v254, 2
        %vm257 = vcmp.ge.s32.totalorder %v254, 1
        %vm258 = vcmp.lt.s32.totalorder %v254, 15
        %vm259 = vcmp.lt.s32.totalorder %v254, 14
        %vm260 = vcmp.lt.s32.totalorder %v254, 13
        %261 = vrot.lane.b32.xlu0 %v239, 3
        %v262 = vpop.permute.xlu0 %261
        %263 = vrot.lane.b32.xlu0 %v240, 3
        %v264 = vpop.permute.xlu0 %263
        %v265 = vsel %vm255, %v262, 0.0
        %v266 = vsel %vm255, %v264, 0.0
        %v267 = vpack.c.bf16 %v266, %v265
        %268 = vst [vmem:[#allocation2] sm:$0xff] %v267
        %269 = vrot.lane.b32.xlu0 %v239, 2
        %v270 = vpop.permute.xlu0 %269
        %271 = vrot.lane.b32.xlu0 %v240, 2
        %v272 = vpop.permute.xlu0 %271
        %v273 = vsel %vm256, %v270, 0.0
        %v274 = vsel %vm256, %v272, 0.0
        %v275 = vpack.c.bf16 %v274, %v273
        %276 = vst [vmem:[#allocation2 + $0x8] sm:$0xff] %v275
        %277 = vrot.lane.b32.xlu0 %v239, 1
        %v278 = vpop.permute.xlu0 %277
        %279 = vrot.lane.b32.xlu0 %v240, 1
        %v280 = vpop.permute.xlu0 %279
        %v281 = vsel %vm257, %v278, 0.0
        %v282 = vsel %vm257, %v280, 0.0
        %v283 = vpack.c.bf16 %v282, %v281
        %284 = vst [vmem:[#allocation2 + $0x10] sm:$0xff] %v283
        %v285 = vpack.c.bf16 %v240, %v239
        %286 = vst [vmem:[#allocation2 + $0x18] sm:$0xff] %v285
        %287 = vrot.lane.b32.xlu0 %v239, 127
        %v288 = vpop.permute.xlu0 %287
        %289 = vrot.lane.b32.xlu0 %v240, 127
        %v290 = vpop.permute.xlu0 %289
        %v291 = vsel %vm258, %v288, 0.0
        %v292 = vsel %vm258, %v290, 0.0
        %v293 = vpack.c.bf16 %v292, %v291
        %294 = vst [vmem:[#allocation2 + $0x20] sm:$0xff] %v293
        %295 = vrot.lane.b32.xlu0 %v239, 126
        %v296 = vpop.permute.xlu0 %295
        %297 = vrot.lane.b32.xlu0 %v240, 126
        %v298 = vpop.permute.xlu0 %297
        %v299 = vsel %vm259, %v296, 0.0
        %v300 = vsel %vm259, %v298, 0.0
        %v301 = vpack.c.bf16 %v300, %v299
        %302 = vst [vmem:[#allocation2 + $0x28] sm:$0xff] %v301
        %303 = vrot.lane.b32.xlu0 %v239, 125
        %v304 = vpop.permute.xlu0 %303
        %305 = vrot.lane.b32.xlu0 %v240, 125
        %v306 = vpop.permute.xlu0 %305
        %v307 = vsel %vm260, %v304, 0.0
        %v308 = vsel %vm260, %v306, 0.0
        %v309 = vpack.c.bf16 %v308, %v307
        %310 = vst [vmem:[#allocation2 + $0x30] sm:$0xff] %v309
        %v311 = vld [vmem:[#allocation3] sm:$0xf]
        %v312 = vld [vmem:[#allocation3 + $0x4] sm:$0xf]
        %v313 = vld [vmem:[#allocation2] sm:$0xff]
        %v314 = vld [vmem:[#allocation2 + $0x8] sm:$0xff]
        %v315 = vld [vmem:[#allocation2 + $0x10] sm:$0xff]
        %v316 = vld [vmem:[#allocation2 + $0x18] sm:$0xff]
        %v317 = vld [vmem:[#allocation2 + $0x20] sm:$0xff]
        %v318 = vld [vmem:[#allocation2 + $0x28] sm:$0xff]
        %v319 = vld [vmem:[#allocation2 + $0x30] sm:$0xff]
        %v320 = vld [vmem:[%s2] sm:$0xff]
        %v321 = vld [vmem:[%s2 + $0x8] sm:$0xff]
        %323 = vset.pattern.permute.xlu0 0
        %324 = vperm.xlu0 %323, %v320
        %v325 = vpop.permute.xlu0 %324
        %328 = vset.pattern.permute.xlu0 0
        %329 = vperm.xlu0 %328, %v321
        %v330 = vpop.permute.xlu0 %329
        %v334 = vunpack.c.l.b16 %v311
        %v335 = vunpack.c.l.b16 %v312
        %v336 = vpack.c.b16 %v335, %v334
        %vm337 = vcmask 916480
        %v339 = vsel %vm337, %v336, 0
        %341 = vmatprep.subr.bf16.mxu0 0
        %342 = vmatpush1.bf16.msra.mxu0 %v313
        %343 = vmatprep.subr.bf16.mxu0 0
        %344 = vmatpush1.bf16.msra.mxu0 %v314
        %345 = vmatprep.subr.bf16.mxu0 0
        %346 = vmatpush1.bf16.msra.mxu0 %v315
        %347 = vmatprep.subr.bf16.mxu0 0
        %348 = vmatpush1.bf16.msra.mxu0 %v316
        %349 = vmatprep.subr.bf16.mxu0 0
        %350 = vmatpush1.bf16.msra.mxu0 %v317
        %351 = vmatprep.subr.bf16.mxu0 0
        %352 = vmatpush1.bf16.msra.mxu0 %v318
        %353 = vmatprep.subr.bf16.mxu0 0
        %354 = vmatpush1.bf16.msra.mxu0 %v319
        %355 = vmatprep.subr.bf16.mxu0 0
        %356 = vmatpush1.bf16.msra.mxu0 0
        %357 = vmatprep.subr.bf16.mxu0 0
        %358 = vmatpush1.bf16.msra.mxu0 0
        %359 = vmatprep.subr.bf16.mxu0 0
        %360 = vmatpush1.bf16.msra.mxu0 0
        %361 = vmatprep.subr.bf16.mxu0 0
        %362 = vmatpush1.bf16.msra.mxu0 0
        %363 = vmatprep.subr.bf16.mxu0 0
        %364 = vmatpush1.bf16.msra.mxu0 0
        %365 = vmatprep.subr.bf16.mxu0 0
        %366 = vmatpush1.bf16.msra.mxu0 0
        %367 = vmatprep.subr.bf16.mxu0 0
        %368 = vmatpush1.bf16.msra.mxu0 0
        %369 = vmatprep.subr.bf16.mxu0 0
        %370 = vmatpush1.bf16.msra.mxu0 0
        %371 = vmatprep.subr.bf16.mxu0 0
        %372 = vmatpush1.bf16.msra.mxu0 0
        %373 = vmatprep.mubr.bf16.mxu0 0
        %374 = vmatmul.mubr.bf16.gmra.mrb[0].mxu0 %v339
        %v375 = vpop.f32.mrb[0].mxu0
        %v376 = vadd.f32 %v325, %v375
        %v377 = vpop.f32.mrb[0].mxu0
        %v378 = vpop.f32.mrb[0].mxu0
        %v379 = vadd.f32 %v330, %v378
        %v380 = vpop.f32.mrb[0].mxu0
        %381 = vdwg.mxu0
        %v382 = vmax.f32 %v376, 0.0
        %v383 = vmax.f32 %v379, 0.0
        %384 = vrot.lane.b32.xlu0 %v382, 3
        %v385 = vpop.permute.xlu0 %384
        %386 = vrot.lane.b32.xlu0 %v383, 3
        %v387 = vpop.permute.xlu0 %386
        %v388 = vsel %vm255, %v385, 0.0
        %v389 = vsel %vm255, %v387, 0.0
        %v390 = vpack.c.bf16 %v389, %v388
        %391 = vst [vmem:[#allocation2] sm:$0xff] %v390
        %392 = vrot.lane.b32.xlu0 %v382, 2
        %v393 = vpop.permute.xlu0 %392
        %394 = vrot.lane.b32.xlu0 %v383, 2
        %v395 = vpop.permute.xlu0 %394
        %v396 = vsel %vm256, %v393, 0.0
        %v397 = vsel %vm256, %v395, 0.0
        %v398 = vpack.c.bf16 %v397, %v396
        %399 = vst [vmem:[#allocation2 + $0x8] sm:$0xff] %v398
        %400 = vrot.lane.b32.xlu0 %v382, 1
        %v401 = vpop.permute.xlu0 %400
        %402 = vrot.lane.b32.xlu0 %v383, 1
        %v403 = vpop.permute.xlu0 %402
        %v404 = vsel %vm257, %v401, 0.0
        %v405 = vsel %vm257, %v403, 0.0
        %v406 = vpack.c.bf16 %v405, %v404
        %407 = vst [vmem:[#allocation2 + $0x10] sm:$0xff] %v406
        %v408 = vpack.c.bf16 %v383, %v382
        %409 = vst [vmem:[#allocation2 + $0x18] sm:$0xff] %v408
        %410 = vrot.lane.b32.xlu0 %v382, 127
        %v411 = vpop.permute.xlu0 %410
        %412 = vrot.lane.b32.xlu0 %v383, 127
        %v413 = vpop.permute.xlu0 %412
        %v414 = vsel %vm258, %v411, 0.0
        %v415 = vsel %vm258, %v413, 0.0
        %v416 = vpack.c.bf16 %v415, %v414
        %417 = vst [vmem:[#allocation2 + $0x20] sm:$0xff] %v416
        %418 = vrot.lane.b32.xlu0 %v382, 126
        %v419 = vpop.permute.xlu0 %418
        %420 = vrot.lane.b32.xlu0 %v383, 126
        %v421 = vpop.permute.xlu0 %420
        %v422 = vsel %vm259, %v419, 0.0
        %v423 = vsel %vm259, %v421, 0.0
        %v424 = vpack.c.bf16 %v423, %v422
        %425 = vst [vmem:[#allocation2 + $0x28] sm:$0xff] %v424
        %426 = vrot.lane.b32.xlu0 %v382, 125
        %v427 = vpop.permute.xlu0 %426
        %428 = vrot.lane.b32.xlu0 %v383, 125
        %v429 = vpop.permute.xlu0 %428
        %v430 = vsel %vm260, %v427, 0.0
        %v431 = vsel %vm260, %v429, 0.0
        %v432 = vpack.c.bf16 %v431, %v430
        %433 = vst [vmem:[#allocation2 + $0x30] sm:$0xff] %v432
        %v434 = vld [vmem:[%s3] sm:$0xf]
        %v435 = vld [vmem:[%s3 + $0x4] sm:$0xf]
        %v436 = vld [vmem:[#allocation2] sm:$0xff]
        %v437 = vld [vmem:[#allocation2 + $0x8] sm:$0xff]
        %v438 = vld [vmem:[#allocation2 + $0x10] sm:$0xff]
        %v439 = vld [vmem:[#allocation2 + $0x18] sm:$0xff]
        %v440 = vld [vmem:[#allocation2 + $0x20] sm:$0xff]
        %v441 = vld [vmem:[#allocation2 + $0x28] sm:$0xff]
        %v442 = vld [vmem:[#allocation2 + $0x30] sm:$0xff]
        %v443 = vld [vmem:[%s4] sm:$0xff]
        %v444 = vld [vmem:[%s4 + $0x8] sm:$0xff]
        %446 = vset.pattern.permute.xlu0 0
        %447 = vperm.xlu0 %446, %v443
        %v448 = vpop.permute.xlu0 %447
        %451 = vset.pattern.permute.xlu0 0
        %452 = vperm.xlu0 %451, %v444
        %v453 = vpop.permute.xlu0 %452
        %v457 = vunpack.c.l.b16 %v434
        %v458 = vunpack.c.l.b16 %v435
        %v459 = vpack.c.b16 %v458, %v457
        %v461 = vsel %vm337, %v459, 0
        %463 = vmatprep.subr.bf16.mxu0 0
        %464 = vmatpush1.bf16.msra.mxu0 %v436
        %465 = vmatprep.subr.bf16.mxu0 0
        %466 = vmatpush1.bf16.msra.mxu0 %v437
        %467 = vmatprep.subr.bf16.mxu0 0
        %468 = vmatpush1.bf16.msra.mxu0 %v438
        %469 = vmatprep.subr.bf16.mxu0 0
        %470 = vmatpush1.bf16.msra.mxu0 %v439
        %471 = vmatprep.subr.bf16.mxu0 0
        %472 = vmatpush1.bf16.msra.mxu0 %v440
        %473 = vmatprep.subr.bf16.mxu0 0
        %474 = vmatpush1.bf16.msra.mxu0 %v441
        %475 = vmatprep.subr.bf16.mxu0 0
        %476 = vmatpush1.bf16.msra.mxu0 %v442
        %477 = vmatprep.subr.bf16.mxu0 0
        %478 = vmatpush1.bf16.msra.mxu0 0
        %479 = vmatprep.subr.bf16.mxu0 0
        %480 = vmatpush1.bf16.msra.mxu0 0
        %481 = vmatprep.subr.bf16.mxu0 0
        %482 = vmatpush1.bf16.msra.mxu0 0
        %483 = vmatprep.subr.bf16.mxu0 0
        %484 = vmatpush1.bf16.msra.mxu0 0
        %485 = vmatprep.subr.bf16.mxu0 0
        %486 = vmatpush1.bf16.msra.mxu0 0
        %487 = vmatprep.subr.bf16.mxu0 0
        %488 = vmatpush1.bf16.msra.mxu0 0
        %489 = vmatprep.subr.bf16.mxu0 0
        %490 = vmatpush1.bf16.msra.mxu0 0
        %491 = vmatprep.subr.bf16.mxu0 0
        %492 = vmatpush1.bf16.msra.mxu0 0
        %493 = vmatprep.subr.bf16.mxu0 0
        %494 = vmatpush1.bf16.msra.mxu0 0
        %495 = vmatprep.mubr.bf16.mxu0 0
        %496 = vmatmul.mubr.bf16.gmra.mrb[0].mxu0 %v461
        %v497 = vpop.f32.mrb[0].mxu0
        %v498 = vadd.f32 %v448, %v497
        %v499 = vpop.f32.mrb[0].mxu0
        %v500 = vpop.f32.mrb[0].mxu0
        %v501 = vadd.f32 %v453, %v500
        %v502 = vpop.f32.mrb[0].mxu0
        %503 = vdwg.mxu0
        %v504 = vmax.f32 %v498, 0.0
        %v505 = vmax.f32 %v501, 0.0
        %v506 = vadd.f32 %v504, %v239
        %v507 = vadd.f32 %v505, %v240
        %508 = vst [vmem:[%s232] sm:$0xff] %v506
        %509 = vst [vmem:[%s232 + $0x8] sm:$0xff] %v507
        %s510 = sand.u32 %s138, 1
        %s511 = scalar_lea.sflag [#allocation5], %s510
        %s512 = sand.u32 %s138, 1
        %s513 = smul.addr %s512, 16
        %s514 = scalar_lea.vmem [#allocation6], %s513
        // Predicated region
        $region45: #{tpu_custom_call.1} parent=39 // pred_check
          %p515 = pneg %p148
        $region46: #{tpu_custom_call.1} parent=39 // pred_check_branch
          %517 = sbr.rel (%p515) target = $region48
        $region47: #{tpu_custom_call.1} parent=39 // pred_region
          %s519 = ssub.s32 256, 256
          %520 = vsyncadd %s511, %s519
          %s521 = smul.addr %s20, 2
          %s522 = smul.addr %s521, 128
          %s523 = scalar_lea.hbm %s5, %s522
          %s524 = sshll.u32 %s514, 4
          %s525 = int_to_ptr.vmem [resolvable:$true] %s524
          %530 = dma.vmem_to_hbm [thread:$0]  %s525, 256, %s523, %s511, 128, 128, 8
        $region48: #{tpu_custom_call.1} parent=39 // pred_fallthru
          _
      $region40: #{tpu_custom_call.1} parent=5 // pred_fallthru
        _
      %p531 = scmp.le.s32.totalorder 2, %s15
      // Predicated region
      $region49: #{tpu_custom_call.1} parent=5 // pred_check
        %p532 = pneg %p531
      $region50: #{tpu_custom_call.1} parent=5 // pred_check_branch
        %534 = sbr.rel (%p532) target = $region52
      $region51: #{tpu_custom_call.1} parent=5 // pred_region
        %s535 = ssub.s32 %s15, 2
        // Predicated region
        $region53: #{tpu_custom_call.1} parent=51 // pred_check
          %p536 = pneg %p154
        $region54: #{tpu_custom_call.1} parent=51 // pred_check_branch
          %538 = sbr.rel (%p536) target = $region56
        $region55: #{tpu_custom_call.1} parent=51 // pred_region
          %s539 = sand.u32 %s139, 1
          %s540 = scalar_lea.sflag [#allocation5], %s539
          %s541 = sand.u32 %s139, 1
          %s542 = smul.addr %s541, 16
          %s543 = scalar_lea.vmem [#allocation6], %s542
          %544 = dma.done %s540, 256
        $region56: #{tpu_custom_call.1} parent=51 // pred_fallthru
          _
      $region52: #{tpu_custom_call.1} parent=5 // pred_fallthru
        _
    $region6: #{tpu_custom_call.1} parent=1 // loop_footer
      %s19 = sadd.s32 1, %s15
    $region7: #{tpu_custom_call.1} parent=1 // loop_footer_branch
      %14 = sbr.rel target = $region3
    $region8: #{tpu_custom_call.1} parent=1 // loop_exit
      _
    %545 = vsyncpa [#allocation4], 1
    %s546 = scalar_lea.sflag [#allocation4], 1
    %547 = vsyncpa %s546, 1
    %548 = vsyncpa [#allocation5], 1
    %s549 = scalar_lea.sflag [#allocation5], 1
    %550 = vsyncpa %s549, 1

</llo_original>
